<compile_context>
chip_gen: v7x
topology: tpu7x:2x2x1
jax: 0.10.0
libtpu: 0.0.40
codegen_flags: <defaults>
</compile_context>

<pallas_src>
import functools

import numpy as np
import jax
import jax.numpy as jnp
from jax.experimental import pallas as pl
from jax.experimental.pallas import tpu as pltpu

EPS = 1e-5
NEG_SLOPE = 0.1          # the module explicitly calls F.leaky_relu(..., 0.1)
LANE = 128
SUBLANE = 8

_VMEM = pl.BlockSpec(memory_space=pltpu.MemorySpace.VMEM)

# TODO(synk): on v6e/v7x, casting matmul operands to bf16 (keeping
# preferred_element_type=f32 and all BN/LReLU math in f32) cuts per-matmul MXU
# latency ~3x; left at f32 here to keep strict parity with the PyTorch ref.
_MM_DTYPE = jnp.float32


def _round_up(n, m):
    return -(-n // m) * m


# ----------------------------- kernel ---------------------------------------


def _bn_lrelu(h):
    """BatchNorm1d (training mode: biased batch stats) + LeakyReLU(0.1).

    Centered variance (matches PyTorch's (x-mean)^2 numerics), compile-time
    1/N multiply, single vmax for the leaky ReLU.
    """
    inv_n = 1.0 / h.shape[0]                       # Python constant
    mean = jnp.sum(h, axis=0, keepdims=True) * inv_n
    c = h - mean
    var = jnp.sum(c * c, axis=0, keepdims=True) * inv_n     # biased
    hn = c * jax.lax.rsqrt(var + EPS)
    return jnp.maximum(hn, NEG_SLOPE * hn)


def _dot(a, b):
    return jnp.dot(a.astype(_MM_DTYPE), b.astype(_MM_DTYPE),
                   preferred_element_type=jnp.float32)


def _make_fused_kernel(layout, n_enc, n_dec, zd_list):
    """Entire forward in one kernel body: kernel(x_ref, params_ref, out_ref).

    `layout[name] = (row_offset, K, N)` locates each pre-composed weight/bias
    block inside the packed parameter slab (row offsets are sublane-aligned).
    """

    def kernel(x_ref, p_ref, out_ref):
        def blk(name):
            off, k, n = layout[name]
            return p_ref[off:off + k, :n]          # static slice: free view

        # ---- encoder 0: Linear -> BN -> LReLU ----
        h = _bn_lrelu(_dot(x_ref[...], blk("w1_0")) + blk("b1_0"))

        # ---- encoders j < n_enc-1: latent head and the NEXT layer's Linear
        # ---- share the same LHS; their weights were concatenated at init, so
        # ---- one dot yields [z_j | pre-BN of layer j+1] (static lane-slice).
        latents_rev = [None] * n_enc               # latents in decoder order
        for j in range(n_enc - 1):
            t = _dot(h, blk(f"wcat_{j}")) + blk(f"bcat_{j}")
            zd = zd_list[j]
            latents_rev[n_enc - 1 - j] = t[:, :zd]
            h = _bn_lrelu(t[:, zd:])

        # ---- deepest latent head pre-composed with decoder 0's Linear
        # ---- (exact: no nonlinearity in between, deepest latent not reused).
        d = _bn_lrelu(_dot(h, blk("wcomb")) + blk("bcomb"))

        # ---- decoders i >= 1: LatentMerge pre-composed with the Linear ----
        for i in range(1, n_dec):
            pre = (_dot(d, blk(f"wcx_{i}")) +
                   _dot(latents_rev[i], blk(f"wcz_{i}")) + blk(f"bc_{i}"))
            d = _bn_lrelu(pre)

        # ---- reconstruction: weight zero-padded to 128 lanes so the only
        # ---- store of the kernel is a full, unmasked vst.
        out_ref[...] = _dot(d, blk("rec_w")) + blk("rec_b")

    return kernel


# --------------------------- pallas wrapper ----------------------------------


def ladder_forward(x, param_slab, *, layout, zd_list, n_enc, n_dec, x_dim,
                   out_pad):
    batch = x.shape[0]
    kernel = _make_fused_kernel(layout, n_enc, n_dec, zd_list)
    # TODO(synk): if this forward runs repeatedly with fixed weights, amortize
    # the (single) parameter DMA across calls via a batch grid whose weight
    # BlockSpec has a constant index_map, or the cross-call prefetch pattern.
    # TODO(synk): for batch >> 8, add a batch grid axis with accumulated BN
    # sum/sum-sq statistics; on v7x split it across the two TensorCores and
    # exchange partials through VMEM_SHARED/CMEM before normalizing.
    out = pl.pallas_call(
        kernel,
        out_shape=jax.ShapeDtypeStruct((batch, out_pad), jnp.float32),
        in_specs=[_VMEM, _VMEM],
        out_specs=_VMEM,
    )(x, param_slab)
    return out[:, :x_dim]


# --------------------------- parameter setup ---------------------------------


def init_raw_params(key, dims):
    """Raw PyTorch-equivalent parameters, (in, out) layout, numpy float64.

    Xavier-normal weights, zero biases (matching the module's init loop).
    The decoder list is already reversed into forward order.
    """
    x_dim, z_dim, h_dim = dims
    keys = iter(jax.random.split(key, 64))

    def xavier(fan_in, fan_out):
        std = (2.0 / (fan_in + fan_out)) ** 0.5
        w = std * jax.random.normal(next(keys), (fan_in, fan_out), jnp.float32)
        return np.asarray(w, np.float64)

    neurons = [x_dim, *h_dim]
    enc = []
    for i in range(1, len(neurons)):
        in_d, h, zd = neurons[i - 1], neurons[i], z_dim[i - 1]
        # TODO(synk): the Stiefel constraint-dissolving parametrization of
        # latent_sample.weight is a training-time penalty only; forward = Linear.
        enc.append(dict(w1=xavier(in_d, h), b1=np.zeros((1, h)),
                        w2=xavier(h, zd), b2=np.zeros((1, zd))))

    dec_neurons = [*h_dim, z_dim[-1]]
    dec = []
    for i in range(len(h_dim)):
        zd, hd, xd = z_dim[i], h_dim[i], dec_neurons[i + 1]
        dec.append(dict(wl=xavier(xd, hd), bl=np.zeros((1, hd)),
                        wm=xavier(xd + zd, xd), bm=np.zeros((1, xd))))
    dec = dec[::-1]

    rec_w = xavier(h_dim[0], x_dim)
    rec_b = np.zeros((1, x_dim))
    return enc, dec, (rec_w, rec_b)


class _SlabBuilder:
    """Packs (K, N<=128) blocks into one (rows, 128) f32 slab, sublane-aligned."""

    def __init__(self):
        self.blocks = []
        self.layout = {}
        self.rows = 0

    def add(self, name, arr):
        arr = np.asarray(arr, np.float32)
        k, n = arr.shape
        assert n <= LANE, (name, arr.shape)
        off = self.rows
        self.layout[name] = (off, k, n)
        self.blocks.append((off, arr))
        self.rows += _round_up(k, SUBLANE)

    def pack(self):
        rows = _round_up(max(self.rows, SUBLANE), SUBLANE)
        slab = np.zeros((rows, LANE), np.float32)
        for off, arr in self.blocks:
            k, n = arr.shape
            slab[off:off + k, :n] = arr
        return jnp.asarray(slab), self.layout


def build_fused_params(enc, dec, rec, x_dim):
    """Init-time weight composition + packing into the single parameter slab."""
    n_enc, n_dec = len(enc), len(dec)
    sb = _SlabBuilder()

    # encoder 0 input Linear
    sb.add("w1_0", enc[0]["w1"])
    sb.add("b1_0", enc[0]["b1"])

    # encoder j latent head || encoder j+1 Linear (same LHS -> concat lanes)
    for j in range(n_enc - 1):
        sb.add(f"wcat_{j}", np.concatenate([enc[j]["w2"], enc[j + 1]["w1"]], 1))
        sb.add(f"bcat_{j}", np.concatenate([enc[j]["b2"], enc[j + 1]["b1"]], 1))

    # deepest latent head ∘ decoder 0 Linear  (exact composition)
    wl0, bl0 = dec[0]["wl"], dec[0]["bl"]
    sb.add("wcomb", enc[-1]["w2"] @ wl0)
    sb.add("bcomb", enc[-1]["b2"] @ wl0 + bl0)

    # decoders i >= 1: LatentMerge ∘ Linear  (exact composition)
    for i in range(1, n_dec):
        p = dec[i]
        xd = p["wl"].shape[0]
        wmx, wmz = p["wm"][:xd], p["wm"][xd:]
        sb.add(f"wcx_{i}", wmx @ p["wl"])
        sb.add(f"wcz_{i}", wmz @ p["wl"])
        sb.add(f"bc_{i}", p["bm"] @ p["wl"] + p["bl"])

    # reconstruction, zero-padded to a lane-dense (multiple of 128) output
    rec_w, rec_b = rec
    out_pad = _round_up(x_dim, LANE)
    rw = np.zeros((rec_w.shape[0], out_pad), np.float32)
    rw[:, :x_dim] = rec_w
    rb = np.zeros((1, out_pad), np.float32)
    rb[:, :x_dim] = rec_b
    sb.add("rec_w", rw)
    sb.add("rec_b", rb)

    slab, layout = sb.pack()
    zd_list = tuple(int(e["w2"].shape[1]) for e in enc)
    return slab, layout, zd_list, out_pad


# --------------------------- numpy reference ---------------------------------


def reference_forward(x, enc, dec, rec):
    """Unfused float64 reference of the PyTorch forward (training-mode BN)."""

    def bn_lrelu(h):
        mean = h.mean(0, keepdims=True)
        var = ((h - mean) ** 2).mean(0, keepdims=True)   # biased
        hn = (h - mean) / np.sqrt(var + EPS)
        return np.maximum(hn, NEG_SLOPE * hn)

    latents = []
    for p in enc:
        h = bn_lrelu(x @ p["w1"] + p["b1"])
        latents.append(h @ p["w2"] + p["b2"])
        x = h
    latents = latents[::-1]
    for i, p in enumerate(dec):
        if i == 0:
            x = latents[0]
        else:
            x = np.concatenate([x, latents[i]], -1) @ p["wm"] + p["bm"]
        x = bn_lrelu(x @ p["wl"] + p["bl"])
    rec_w, rec_b = rec
    return x @ rec_w + rec_b


# ------------------------------- main ----------------------------------------

if __name__ == "__main__":
    # dims = [x_dim, z_dim(list), h_dim(list)]
    x_dim = 16
    z_dim = [8, 4]
    h_dim = [32, 16]
    batch = 8

    key = jax.random.PRNGKey(0)
    k_x, k_p = jax.random.split(key)
    x = jax.random.normal(k_x, (batch, x_dim), jnp.float32)

    enc, dec, rec = init_raw_params(k_p, [x_dim, z_dim, h_dim])
    slab, layout, zd_list, out_pad = build_fused_params(enc, dec, rec, x_dim)

    fwd = jax.jit(
        functools.partial(
            ladder_forward,
            layout=layout,
            zd_list=zd_list,
            n_enc=len(enc),
            n_dec=len(dec),
            x_dim=x_dim,
            out_pad=out_pad,
        )
    )
    x_mu = fwd(x, slab)
    jax.block_until_ready(x_mu)

    assert x_mu.shape == (batch, x_dim), x_mu.shape
    assert bool(jnp.all(jnp.isfinite(x_mu)))

    # Loose tolerance: covers TPU MXU f32 emulation + BN rsqrt amplification,
    # while any structural error (wrong weight/latent/slice) is O(1) off.
    ref = reference_forward(np.asarray(x, np.float64), enc, dec, rec)
    np.testing.assert_allclose(np.asarray(x_mu, np.float64), ref,
                               rtol=1e-1, atol=1e-1)
    print("KERNEL_OK")
</pallas_src>

<mosaic_0001>
module attributes {stable_mosaic.version = 11 : i64} {
  func.func @kernel(%arg0: memref<8x16xf32, #tpu.memory_space<vmem>>, %arg1: memref<160x128xf32, #tpu.memory_space<vmem>>, %arg2: memref<8x128xf32, #tpu.memory_space<vmem>>) attributes {dimension_semantics = [], scalar_prefetch = 0 : i64, scratch_operands = 0 : i64, tpu.core_type = #tpu.core_type<tc>} {
    %c0 = arith.constant 0 : index
    %c0_0 = arith.constant 0 : index
    %0 = vector.load %arg0[%c0, %c0_0] : memref<8x16xf32, #tpu.memory_space<vmem>>, vector<8x16xf32>
    %c0_1 = arith.constant 0 : index
    %c0_2 = arith.constant 0 : index
    %1 = vector.load %arg1[%c0_1, %c0_2] : memref<160x128xf32, #tpu.memory_space<vmem>>, vector<16x32xf32>
    %cst = arith.constant dense<0.000000e+00> : vector<8x32xf32>
    %2 = tpu.matmul %0, %1, %cst {dimension_numbers = #tpu.dot_dimension_numbers<[1], [0], [0], [1], [0, 0, 1, 1], [], []>} : vector<8x16xf32>, vector<16x32xf32>, vector<8x32xf32> -> vector<8x32xf32>
    %c16 = arith.constant 16 : index
    %c0_3 = arith.constant 0 : index
    %3 = vector.load %arg1[%c16, %c0_3] : memref<160x128xf32, #tpu.memory_space<vmem>>, vector<1x32xf32>
    %4 = vector.broadcast %3 : vector<1x32xf32> to vector<8x32xf32>
    %5 = arith.addf %2, %4 : vector<8x32xf32>
    %cst_4 = arith.constant dense<0.000000e+00> : vector<32xf32>
    %6 = vector.multi_reduction <add>, %5, %cst_4 [0] : vector<8x32xf32> to vector<32xf32>
    %7 = vector.shape_cast %6 : vector<32xf32> to vector<1x32xf32>
    %cst_5 = arith.constant 1.250000e-01 : f32
    %8 = vector.broadcast %cst_5 : f32 to vector<1x32xf32>
    %9 = arith.mulf %7, %8 : vector<1x32xf32>
    %10 = vector.broadcast %9 : vector<1x32xf32> to vector<8x32xf32>
    %11 = arith.subf %5, %10 : vector<8x32xf32>
    %12 = arith.mulf %11, %11 : vector<8x32xf32>
    %cst_6 = arith.constant dense<0.000000e+00> : vector<32xf32>
    %13 = vector.multi_reduction <add>, %12, %cst_6 [0] : vector<8x32xf32> to vector<32xf32>
    %14 = vector.shape_cast %13 : vector<32xf32> to vector<1x32xf32>
    %cst_7 = arith.constant 1.250000e-01 : f32
    %15 = vector.broadcast %cst_7 : f32 to vector<1x32xf32>
    %16 = arith.mulf %14, %15 : vector<1x32xf32>
    %cst_8 = arith.constant 9.99999974E-6 : f32
    %17 = vector.broadcast %cst_8 : f32 to vector<1x32xf32>
    %18 = arith.addf %16, %17 : vector<1x32xf32>
    %19 = math.rsqrt %18 : vector<1x32xf32>
    %20 = vector.broadcast %19 : vector<1x32xf32> to vector<8x32xf32>
    %21 = arith.mulf %11, %20 : vector<8x32xf32>
    %cst_9 = arith.constant 1.000000e-01 : f32
    %22 = vector.broadcast %cst_9 : f32 to vector<8x32xf32>
    %23 = arith.mulf %22, %21 : vector<8x32xf32>
    %24 = arith.maximumf %21, %23 : vector<8x32xf32>
    %c24 = arith.constant 24 : index
    %c0_10 = arith.constant 0 : index
    %25 = vector.load %arg1[%c24, %c0_10] : memref<160x128xf32, #tpu.memory_space<vmem>>, vector<32x24xf32>
    %cst_11 = arith.constant dense<0.000000e+00> : vector<8x24xf32>
    %26 = tpu.matmul %24, %25, %cst_11 {dimension_numbers = #tpu.dot_dimension_numbers<[1], [0], [0], [1], [0, 0, 1, 1], [], []>} : vector<8x32xf32>, vector<32x24xf32>, vector<8x24xf32> -> vector<8x24xf32>
    %c56 = arith.constant 56 : index
    %c0_12 = arith.constant 0 : index
    %27 = vector.load %arg1[%c56, %c0_12] : memref<160x128xf32, #tpu.memory_space<vmem>>, vector<1x24xf32>
    %28 = vector.broadcast %27 : vector<1x24xf32> to vector<8x24xf32>
    %29 = arith.addf %26, %28 : vector<8x24xf32>
    %30 = vector.extract_strided_slice %29 {offsets = [0, 0], sizes = [8, 8], strides = [1, 1]} : vector<8x24xf32> to vector<8x8xf32>
    %31 = vector.extract_strided_slice %29 {offsets = [0, 8], sizes = [8, 16], strides = [1, 1]} : vector<8x24xf32> to vector<8x16xf32>
    %cst_13 = arith.constant dense<0.000000e+00> : vector<16xf32>
    %32 = vector.multi_reduction <add>, %31, %cst_13 [0] : vector<8x16xf32> to vector<16xf32>
    %33 = vector.shape_cast %32 : vector<16xf32> to vector<1x16xf32>
    %cst_14 = arith.constant 1.250000e-01 : f32
    %34 = vector.broadcast %cst_14 : f32 to vector<1x16xf32>
    %35 = arith.mulf %33, %34 : vector<1x16xf32>
    %36 = vector.broadcast %35 : vector<1x16xf32> to vector<8x16xf32>
    %37 = arith.subf %31, %36 : vector<8x16xf32>
    %38 = arith.mulf %37, %37 : vector<8x16xf32>
    %cst_15 = arith.constant dense<0.000000e+00> : vector<16xf32>
    %39 = vector.multi_reduction <add>, %38, %cst_15 [0] : vector<8x16xf32> to vector<16xf32>
    %40 = vector.shape_cast %39 : vector<16xf32> to vector<1x16xf32>
    %cst_16 = arith.constant 1.250000e-01 : f32
    %41 = vector.broadcast %cst_16 : f32 to vector<1x16xf32>
    %42 = arith.mulf %40, %41 : vector<1x16xf32>
    %cst_17 = arith.constant 9.99999974E-6 : f32
    %43 = vector.broadcast %cst_17 : f32 to vector<1x16xf32>
    %44 = arith.addf %42, %43 : vector<1x16xf32>
    %45 = math.rsqrt %44 : vector<1x16xf32>
    %46 = vector.broadcast %45 : vector<1x16xf32> to vector<8x16xf32>
    %47 = arith.mulf %37, %46 : vector<8x16xf32>
    %cst_18 = arith.constant 1.000000e-01 : f32
    %48 = vector.broadcast %cst_18 : f32 to vector<8x16xf32>
    %49 = arith.mulf %48, %47 : vector<8x16xf32>
    %50 = arith.maximumf %47, %49 : vector<8x16xf32>
    %c64 = arith.constant 64 : index
    %c0_19 = arith.constant 0 : index
    %51 = vector.load %arg1[%c64, %c0_19] : memref<160x128xf32, #tpu.memory_space<vmem>>, vector<16x16xf32>
    %cst_20 = arith.constant dense<0.000000e+00> : vector<8x16xf32>
    %52 = tpu.matmul %50, %51, %cst_20 {dimension_numbers = #tpu.dot_dimension_numbers<[1], [0], [0], [1], [0, 0, 1, 1], [], []>} : vector<8x16xf32>, vector<16x16xf32>, vector<8x16xf32> -> vector<8x16xf32>
    %c80 = arith.constant 80 : index
    %c0_21 = arith.constant 0 : index
    %53 = vector.load %arg1[%c80, %c0_21] : memref<160x128xf32, #tpu.memory_space<vmem>>, vector<1x16xf32>
    %54 = vector.broadcast %53 : vector<1x16xf32> to vector<8x16xf32>
    %55 = arith.addf %52, %54 : vector<8x16xf32>
    %cst_22 = arith.constant dense<0.000000e+00> : vector<16xf32>
    %56 = vector.multi_reduction <add>, %55, %cst_22 [0] : vector<8x16xf32> to vector<16xf32>
    %57 = vector.shape_cast %56 : vector<16xf32> to vector<1x16xf32>
    %cst_23 = arith.constant 1.250000e-01 : f32
    %58 = vector.broadcast %cst_23 : f32 to vector<1x16xf32>
    %59 = arith.mulf %57, %58 : vector<1x16xf32>
    %60 = vector.broadcast %59 : vector<1x16xf32> to vector<8x16xf32>
    %61 = arith.subf %55, %60 : vector<8x16xf32>
    %62 = arith.mulf %61, %61 : vector<8x16xf32>
    %cst_24 = arith.constant dense<0.000000e+00> : vector<16xf32>
    %63 = vector.multi_reduction <add>, %62, %cst_24 [0] : vector<8x16xf32> to vector<16xf32>
    %64 = vector.shape_cast %63 : vector<16xf32> to vector<1x16xf32>
    %cst_25 = arith.constant 1.250000e-01 : f32
    %65 = vector.broadcast %cst_25 : f32 to vector<1x16xf32>
    %66 = arith.mulf %64, %65 : vector<1x16xf32>
    %cst_26 = arith.constant 9.99999974E-6 : f32
    %67 = vector.broadcast %cst_26 : f32 to vector<1x16xf32>
    %68 = arith.addf %66, %67 : vector<1x16xf32>
    %69 = math.rsqrt %68 : vector<1x16xf32>
    %70 = vector.broadcast %69 : vector<1x16xf32> to vector<8x16xf32>
    %71 = arith.mulf %61, %70 : vector<8x16xf32>
    %cst_27 = arith.constant 1.000000e-01 : f32
    %72 = vector.broadcast %cst_27 : f32 to vector<8x16xf32>
    %73 = arith.mulf %72, %71 : vector<8x16xf32>
    %74 = arith.maximumf %71, %73 : vector<8x16xf32>
    %c88 = arith.constant 88 : index
    %c0_28 = arith.constant 0 : index
    %75 = vector.load %arg1[%c88, %c0_28] : memref<160x128xf32, #tpu.memory_space<vmem>>, vector<16x32xf32>
    %cst_29 = arith.constant dense<0.000000e+00> : vector<8x32xf32>
    %76 = tpu.matmul %74, %75, %cst_29 {dimension_numbers = #tpu.dot_dimension_numbers<[1], [0], [0], [1], [0, 0, 1, 1], [], []>} : vector<8x16xf32>, vector<16x32xf32>, vector<8x32xf32> -> vector<8x32xf32>
    %c104 = arith.constant 104 : index
    %c0_30 = arith.constant 0 : index
    %77 = vector.load %arg1[%c104, %c0_30] : memref<160x128xf32, #tpu.memory_space<vmem>>, vector<8x32xf32>
    %cst_31 = arith.constant dense<0.000000e+00> : vector<8x32xf32>
    %78 = tpu.matmul %30, %77, %cst_31 {dimension_numbers = #tpu.dot_dimension_numbers<[1], [0], [0], [1], [0, 0, 1, 1], [], []>} : vector<8x8xf32>, vector<8x32xf32>, vector<8x32xf32> -> vector<8x32xf32>
    %79 = arith.addf %76, %78 : vector<8x32xf32>
    %c112 = arith.constant 112 : index
    %c0_32 = arith.constant 0 : index
    %80 = vector.load %arg1[%c112, %c0_32] : memref<160x128xf32, #tpu.memory_space<vmem>>, vector<1x32xf32>
    %81 = vector.broadcast %80 : vector<1x32xf32> to vector<8x32xf32>
    %82 = arith.addf %79, %81 : vector<8x32xf32>
    %cst_33 = arith.constant dense<0.000000e+00> : vector<32xf32>
    %83 = vector.multi_reduction <add>, %82, %cst_33 [0] : vector<8x32xf32> to vector<32xf32>
    %84 = vector.shape_cast %83 : vector<32xf32> to vector<1x32xf32>
    %cst_34 = arith.constant 1.250000e-01 : f32
    %85 = vector.broadcast %cst_34 : f32 to vector<1x32xf32>
    %86 = arith.mulf %84, %85 : vector<1x32xf32>
    %87 = vector.broadcast %86 : vector<1x32xf32> to vector<8x32xf32>
    %88 = arith.subf %82, %87 : vector<8x32xf32>
    %89 = arith.mulf %88, %88 : vector<8x32xf32>
    %cst_35 = arith.constant dense<0.000000e+00> : vector<32xf32>
    %90 = vector.multi_reduction <add>, %89, %cst_35 [0] : vector<8x32xf32> to vector<32xf32>
    %91 = vector.shape_cast %90 : vector<32xf32> to vector<1x32xf32>
    %cst_36 = arith.constant 1.250000e-01 : f32
    %92 = vector.broadcast %cst_36 : f32 to vector<1x32xf32>
    %93 = arith.mulf %91, %92 : vector<1x32xf32>
    %cst_37 = arith.constant 9.99999974E-6 : f32
    %94 = vector.broadcast %cst_37 : f32 to vector<1x32xf32>
    %95 = arith.addf %93, %94 : vector<1x32xf32>
    %96 = math.rsqrt %95 : vector<1x32xf32>
    %97 = vector.broadcast %96 : vector<1x32xf32> to vector<8x32xf32>
    %98 = arith.mulf %88, %97 : vector<8x32xf32>
    %cst_38 = arith.constant 1.000000e-01 : f32
    %99 = vector.broadcast %cst_38 : f32 to vector<8x32xf32>
    %100 = arith.mulf %99, %98 : vector<8x32xf32>
    %101 = arith.maximumf %98, %100 : vector<8x32xf32>
    %c120 = arith.constant 120 : index
    %c0_39 = arith.constant 0 : index
    %102 = vector.load %arg1[%c120, %c0_39] : memref<160x128xf32, #tpu.memory_space<vmem>>, vector<32x128xf32>
    %cst_40 = arith.constant dense<0.000000e+00> : vector<8x128xf32>
    %103 = tpu.matmul %101, %102, %cst_40 {dimension_numbers = #tpu.dot_dimension_numbers<[1], [0], [0], [1], [0, 0, 1, 1], [], []>} : vector<8x32xf32>, vector<32x128xf32>, vector<8x128xf32> -> vector<8x128xf32>
    %c152 = arith.constant 152 : index
    %c0_41 = arith.constant 0 : index
    %104 = vector.load %arg1[%c152, %c0_41] : memref<160x128xf32, #tpu.memory_space<vmem>>, vector<1x128xf32>
    %105 = vector.broadcast %104 : vector<1x128xf32> to vector<8x128xf32>
    %106 = arith.addf %103, %105 : vector<8x128xf32>
    %c0_42 = arith.constant 0 : index
    %c0_43 = arith.constant 0 : index
    %107 = vector.load %arg2[%c0_42, %c0_43] : memref<8x128xf32, #tpu.memory_space<vmem>>, vector<8x128xf32>
    tpu.vector_store %arg2[%c0_42, %c0_43], %106 {strides = array<i32>} : memref<8x128xf32, #tpu.memory_space<vmem>>, vector<8x128xf32>,
    return
  }
}

</mosaic_0001>

<llo_original>
// kernel: ladder_forward.1
$region0: #{ladder_forward.1}
  #allocation0 [shape = 'u32[]', space=smem, size = 0x4, offset = 0x4, fixed_abs, tag = 'smem constant byte address 0x4 - core index']
  #allocation1 [shape = 'u32[144,128]{1,0:T(1,128)}', space=vmem, size = 0x12000, scoped, tag = 'internal scratch']
  %s0 = inlined_call_operand.hbm [shape: f32[8,16], index: 0, kind: input, shape index: {}]
  %s1 = inlined_call_operand.hbm [shape: f32[160,128], index: 1, kind: input, shape index: {}]
  %s2 = inlined_call_operand.hbm [shape: f32[8,128], index: 2, kind: output, shape index: {}]
  %s3 = sld [smem:[#allocation0]]
  $region26: #{ladder_forward.1} parent=0
    _
  %s5 = ssub.s32 1, %s3
  %s6 = scalar_select 0, %s5, %s3
  $region1: #{ladder_forward.1} parent=0
    #allocation2 [shape = 'u8[4096]{0}', space=vmem, size = 0x1000, scoped, tag = 'input window, operand 0, single buffered']
    #allocation3 [shape = 's32[1]{0}', space=sflag, size = 0x4, scoped, tag = 'scoped memory for ladder_forward.1']
    #allocation4 [shape = 's32[1]{0}', space=sflag, size = 0x4, scoped, tag = 'scoped memory for ladder_forward.1']
    #allocation5 [shape = 'u8[81920]{0}', space=vmem, size = 0x14000, scoped, tag = 'input window, operand 1, single buffered']
    #allocation6 [shape = 's32[1]{0}', space=sflag, size = 0x4, scoped, tag = 'scoped memory for ladder_forward.1']
    #allocation7 [shape = 'u8[4096]{0}', space=vmem, size = 0x1000, scoped, tag = 'output window, operand 0, single buffered']
    %7 = vsyncpa [#allocation3], 0
    %8 = vsyncpa [#allocation6], 0
    %9 = vsyncpa [#allocation4], 0
    // Predicated region
    $region2: #{ladder_forward.1} parent=1 // pred_check
      _
    $region3: #{ladder_forward.1} parent=1 // pred_check_branch
      %11 = sbr.rel (0) target = $region5
    $region4: #{ladder_forward.1} parent=1 // pred_region
      %s13 = ssub.s32 128, 128
      %14 = vsyncadd [#allocation3], %s13
      %s16 = sshll.u32 [#allocation2], 4
      %s17 = int_to_ptr.vmem [resolvable:$true] %s16
      %19 = dma.hbm_to_vmem [thread:$0]  %s0, 128, %s17, [#allocation3]
    $region5: #{ladder_forward.1} parent=1 // pred_fallthru
      _
    // Predicated region
    $region6: #{ladder_forward.1} parent=1 // pred_check
      _
    $region7: #{ladder_forward.1} parent=1 // pred_check_branch
      %21 = sbr.rel (0) target = $region9
    $region8: #{ladder_forward.1} parent=1 // pred_region
      %s23 = ssub.s32 2560, 2560
      %24 = vsyncadd [#allocation6], %s23
      %s25 = sshll.u32 [#allocation5], 4
      %s26 = int_to_ptr.vmem [resolvable:$true] %s25
      %31 = dma.hbm_to_vmem [thread:$0]  %s1, 2560, %s26, [#allocation6], 128, 128, 8
    $region9: #{ladder_forward.1} parent=1 // pred_fallthru
      _
    // Predicated region
    $region10: #{ladder_forward.1} parent=1 // pred_check
      _
    $region11: #{ladder_forward.1} parent=1 // pred_check_branch
      %33 = sbr.rel (0) target = $region13
    $region12: #{ladder_forward.1} parent=1 // pred_region
      %34 = dma.done [#allocation3], 128
    $region13: #{ladder_forward.1} parent=1 // pred_fallthru
      _
    // Predicated region
    $region14: #{ladder_forward.1} parent=1 // pred_check
      _
    $region15: #{ladder_forward.1} parent=1 // pred_check_branch
      %36 = sbr.rel (0) target = $region17
    $region16: #{ladder_forward.1} parent=1 // pred_region
      %37 = dma.done [#allocation6], 2560
    $region17: #{ladder_forward.1} parent=1 // pred_fallthru
      _
    %v38 = vld [vmem:[#allocation2] sm:$0xff]
    %v39 = vld [vmem:[#allocation5] sm:$0xff]
    %v40 = vld [vmem:[#allocation5 + $0x8] sm:$0xff]
    %v41 = vld [vmem:[#allocation5 + $0x10] sm:$0x1]
    %v42 = vlaneseq
    %v43 = vshrl.u32 %v42, 7
    %v44 = vsub.s32 0, %v43
    %v45 = vrot.slane %v41, %v44
    %vm46 = vcmask 130048
    %v48 = vsel %vm46, %v38, 0
    %50 = vmatprep.subr.mxu0 0.0
    %51 = vmatpush1.msra.mxu0 %v39
    %52 = vmatprep.subr.mxu0 0.0
    %53 = vmatpush1.msra.mxu0 %v40
    %54 = vmatprep.subr.mxu0 0.0
    %55 = vmatpush1.msra.mxu0 0.0
    %56 = vmatprep.subr.mxu0 0.0
    %57 = vmatpush1.msra.mxu0 0.0
    %58 = vmatprep.subr.mxu0 0.0
    %59 = vmatpush1.msra.mxu0 0.0
    %60 = vmatprep.subr.mxu0 0.0
    %61 = vmatpush1.msra.mxu0 0.0
    %62 = vmatprep.subr.mxu0 0.0
    %63 = vmatpush1.msra.mxu0 0.0
    %64 = vmatprep.subr.mxu0 0.0
    %65 = vmatpush1.msra.mxu0 0.0
    %66 = vmatprep.subr.mxu0 0.0
    %67 = vmatpush1.msra.mxu0 0.0
    %68 = vmatprep.subr.mxu0 0.0
    %69 = vmatpush1.msra.mxu0 0.0
    %70 = vmatprep.subr.mxu0 0.0
    %71 = vmatpush1.msra.mxu0 0.0
    %72 = vmatprep.subr.mxu0 0.0
    %73 = vmatpush1.msra.mxu0 0.0
    %74 = vmatprep.subr.mxu0 0.0
    %75 = vmatpush1.msra.mxu0 0.0
    %76 = vmatprep.subr.mxu0 0.0
    %77 = vmatpush1.msra.mxu0 0.0
    %78 = vmatprep.subr.mxu0 0.0
    %79 = vmatpush1.msra.mxu0 0.0
    %80 = vmatprep.subr.mxu0 0.0
    %81 = vmatpush1.msra.mxu0 0.0
    %82 = vmatprep.subr.mxu0 0.0
    %83 = vmatpush1.msra.mxu0 0.0
    %84 = vmatprep.subr.mxu0 0.0
    %85 = vmatpush1.msra.mxu0 0.0
    %86 = vmatprep.subr.mxu0 0.0
    %87 = vmatpush1.msra.mxu0 0.0
    %88 = vmatprep.subr.mxu0 0.0
    %89 = vmatpush1.msra.mxu0 0.0
    %90 = vmatprep.subr.mxu0 0.0
    %91 = vmatpush1.msra.mxu0 0.0
    %92 = vmatprep.subr.mxu0 0.0
    %93 = vmatpush1.msra.mxu0 0.0
    %94 = vmatprep.subr.mxu0 0.0
    %95 = vmatpush1.msra.mxu0 0.0
    %96 = vmatprep.subr.mxu0 0.0
    %97 = vmatpush1.msra.mxu0 0.0
    %98 = vmatprep.subr.mxu0 0.0
    %99 = vmatpush1.msra.mxu0 0.0
    %100 = vmatprep.subr.mxu0 0.0
    %101 = vmatpush1.msra.mxu0 0.0
    %102 = vmatprep.subr.mxu0 0.0
    %103 = vmatpush1.msra.mxu0 0.0
    %104 = vmatprep.subr.mxu0 0.0
    %105 = vmatpush1.msra.mxu0 0.0
    %106 = vmatprep.subr.mxu0 0.0
    %107 = vmatpush1.msra.mxu0 0.0
    %108 = vmatprep.subr.mxu0 0.0
    %109 = vmatpush1.msra.mxu0 0.0
    %110 = vmatprep.subr.mxu0 0.0
    %111 = vmatpush1.msra.mxu0 0.0
    %112 = vmatprep.subr.mxu0 0.0
    %113 = vmatpush1.msra.mxu0 0.0
    %114 = vmatprep.mubr.f32.mxu0 0.0
    %115 = vmatmul.mubr.f32.gmra.mrb[0].mxu0 %v48
    %v116 = vpop.f32.mrb[0].mxu0
    %v117 = vadd.f32 %v45, %v116
    %v118 = vpop.f32.mrb[0].mxu0
    %119 = vdwg.mxu0
    %vm120 = vcmask 261120
    %v121 = vsel %vm120, %v117, 0.0
    %v122 = vrot.slane %v121, 4
    %v123 = vadd.f32 %v121, %v122
    %v124 = vrot.slane %v123, 2
    %v125 = vadd.f32 %v123, %v124
    %v126 = vrot.slane %v125, 1
    %v127 = vadd.f32 %v125, %v126
    %v128 = vmul.f32 %v127, 0.125
    %v129 = vsub.f32 %v117, %v128
    %v130 = vmul.f32 %v129, %v129
    %v131 = vsel %vm120, %v130, 0.0
    %v132 = vrot.slane %v131, 4
    %v133 = vadd.f32 %v131, %v132
    %v134 = vrot.slane %v133, 2
    %v135 = vadd.f32 %v133, %v134
    %v136 = vrot.slane %v135, 1
    %v137 = vadd.f32 %v135, %v136
    %v138 = vmul.f32 %v137, 0.125
    %v139 = vadd.f32 %v138, 1e-05
    %v140 = vrsqrt.pop %v139
    %v141 = vmul.f32 %v129, %v140
    %v142 = vmul.f32 %v141, 0.1
    %v143 = vmax.f32 %v141, %v142
    %v144 = vld [vmem:[#allocation5 + $0x18] sm:$0xff]
    %v145 = vld [vmem:[#allocation5 + $0x20] sm:$0xff]
    %v146 = vld [vmem:[#allocation5 + $0x28] sm:$0xff]
    %v147 = vld [vmem:[#allocation5 + $0x30] sm:$0xff]
    %v148 = vld [vmem:[#allocation5 + $0x38] sm:$0x1]
    %v149 = vlaneseq
    %v150 = vshrl.u32 %v149, 7
    %v151 = vsub.s32 0, %v150
    %v152 = vrot.slane %v148, %v151
    %v154 = vsel %vm120, %v143, 0
    %156 = vmatprep.subr.mxu0 0.0
    %157 = vmatpush1.msra.mxu0 %v144
    %158 = vmatprep.subr.mxu0 0.0
    %159 = vmatpush1.msra.mxu0 %v145
    %160 = vmatprep.subr.mxu0 0.0
    %161 = vmatpush1.msra.mxu0 %v146
    %162 = vmatprep.subr.mxu0 0.0
    %163 = vmatpush1.msra.mxu0 %v147
    %164 = vmatprep.subr.mxu0 0.0
    %165 = vmatpush1.msra.mxu0 0.0
    %166 = vmatprep.subr.mxu0 0.0
    %167 = vmatpush1.msra.mxu0 0.0
    %168 = vmatprep.subr.mxu0 0.0
    %169 = vmatpush1.msra.mxu0 0.0
    %170 = vmatprep.subr.mxu0 0.0
    %171 = vmatpush1.msra.mxu0 0.0
    %172 = vmatprep.subr.mxu0 0.0
    %173 = vmatpush1.msra.mxu0 0.0
    %174 = vmatprep.subr.mxu0 0.0
    %175 = vmatpush1.msra.mxu0 0.0
    %176 = vmatprep.subr.mxu0 0.0
    %177 = vmatpush1.msra.mxu0 0.0
    %178 = vmatprep.subr.mxu0 0.0
    %179 = vmatpush1.msra.mxu0 0.0
    %180 = vmatprep.subr.mxu0 0.0
    %181 = vmatpush1.msra.mxu0 0.0
    %182 = vmatprep.subr.mxu0 0.0
    %183 = vmatpush1.msra.mxu0 0.0
    %184 = vmatprep.subr.mxu0 0.0
    %185 = vmatpush1.msra.mxu0 0.0
    %186 = vmatprep.subr.mxu0 0.0
    %187 = vmatpush1.msra.mxu0 0.0
    %188 = vmatprep.subr.mxu0 0.0
    %189 = vmatpush1.msra.mxu0 0.0
    %190 = vmatprep.subr.mxu0 0.0
    %191 = vmatpush1.msra.mxu0 0.0
    %192 = vmatprep.subr.mxu0 0.0
    %193 = vmatpush1.msra.mxu0 0.0
    %194 = vmatprep.subr.mxu0 0.0
    %195 = vmatpush1.msra.mxu0 0.0
    %196 = vmatprep.subr.mxu0 0.0
    %197 = vmatpush1.msra.mxu0 0.0
    %198 = vmatprep.subr.mxu0 0.0
    %199 = vmatpush1.msra.mxu0 0.0
    %200 = vmatprep.subr.mxu0 0.0
    %201 = vmatpush1.msra.mxu0 0.0
    %202 = vmatprep.subr.mxu0 0.0
    %203 = vmatpush1.msra.mxu0 0.0
    %204 = vmatprep.subr.mxu0 0.0
    %205 = vmatpush1.msra.mxu0 0.0
    %206 = vmatprep.subr.mxu0 0.0
    %207 = vmatpush1.msra.mxu0 0.0
    %208 = vmatprep.subr.mxu0 0.0
    %209 = vmatpush1.msra.mxu0 0.0
    %210 = vmatprep.subr.mxu0 0.0
    %211 = vmatpush1.msra.mxu0 0.0
    %212 = vmatprep.subr.mxu0 0.0
    %213 = vmatpush1.msra.mxu0 0.0
    %214 = vmatprep.subr.mxu0 0.0
    %215 = vmatpush1.msra.mxu0 0.0
    %216 = vmatprep.subr.mxu0 0.0
    %217 = vmatpush1.msra.mxu0 0.0
    %218 = vmatprep.subr.mxu0 0.0
    %219 = vmatpush1.msra.mxu0 0.0
    %220 = vmatprep.mubr.f32.mxu0 0.0
    %221 = vmatmul.mubr.f32.gmra.mrb[0].mxu0 %v154
    %v222 = vpop.f32.mrb[0].mxu0
    %v223 = vadd.f32 %v152, %v222
    %v224 = vpop.f32.mrb[0].mxu0
    %225 = vdwg.mxu0
    %vm226 = vcmask 195648
    %v227 = vsel %vm226, %v223, 0.0
    %v228 = vrot.slane %v227, 4
    %v229 = vadd.f32 %v227, %v228
    %v230 = vrot.slane %v229, 2
    %v231 = vadd.f32 %v229, %v230
    %v232 = vrot.slane %v231, 1
    %v233 = vadd.f32 %v231, %v232
    %v234 = vmul.f32 %v233, 0.125
    %v235 = vsub.f32 %v223, %v234
    %v236 = vmul.f32 %v235, %v235
    %v237 = vsel %vm226, %v236, 0.0
    %v238 = vrot.slane %v237, 4
    %v239 = vadd.f32 %v237, %v238
    %v240 = vrot.slane %v239, 2
    %v241 = vadd.f32 %v239, %v240
    %v242 = vrot.slane %v241, 1
    %v243 = vadd.f32 %v241, %v242
    %v244 = vmul.f32 %v243, 0.125
    %v245 = vadd.f32 %v244, 1e-05
    %v246 = vrsqrt.pop %v245
    %v247 = vmul.f32 %v235, %v246
    %v248 = vmul.f32 %v247, 0.1
    %v249 = vmax.f32 %v247, %v248
    %v250 = vld [vmem:[#allocation5 + $0x40] sm:$0xff]
    %v251 = vld [vmem:[#allocation5 + $0x48] sm:$0xff]
    %v252 = vld [vmem:[#allocation5 + $0x50] sm:$0x1]
    %v253 = vlaneseq
    %v254 = vshrl.u32 %v253, 7
    %v255 = vsub.s32 0, %v254
    %v256 = vrot.slane %v252, %v255
    %258 = vrot.lane.b32.xlu0 %v249, 120
    %v259 = vpop.permute.xlu0 %258
    %v260 = vsel %vm46, %v259, 0
    %262 = vmatprep.subr.mxu0 0.0
    %263 = vmatpush1.msra.mxu0 %v250
    %264 = vmatprep.subr.mxu0 0.0
    %265 = vmatpush1.msra.mxu0 %v251
    %266 = vmatprep.subr.mxu0 0.0
    %267 = vmatpush1.msra.mxu0 0.0
    %268 = vmatprep.subr.mxu0 0.0
    %269 = vmatpush1.msra.mxu0 0.0
    %270 = vmatprep.subr.mxu0 0.0
    %271 = vmatpush1.msra.mxu0 0.0
    %272 = vmatprep.subr.mxu0 0.0
    %273 = vmatpush1.msra.mxu0 0.0
    %274 = vmatprep.subr.mxu0 0.0
    %275 = vmatpush1.msra.mxu0 0.0
    %276 = vmatprep.subr.mxu0 0.0
    %277 = vmatpush1.msra.mxu0 0.0
    %278 = vmatprep.subr.mxu0 0.0
    %279 = vmatpush1.msra.mxu0 0.0
    %280 = vmatprep.subr.mxu0 0.0
    %281 = vmatpush1.msra.mxu0 0.0
    %282 = vmatprep.subr.mxu0 0.0
    %283 = vmatpush1.msra.mxu0 0.0
    %284 = vmatprep.subr.mxu0 0.0
    %285 = vmatpush1.msra.mxu0 0.0
    %286 = vmatprep.subr.mxu0 0.0
    %287 = vmatpush1.msra.mxu0 0.0
    %288 = vmatprep.subr.mxu0 0.0
    %289 = vmatpush1.msra.mxu0 0.0
    %290 = vmatprep.subr.mxu0 0.0
    %291 = vmatpush1.msra.mxu0 0.0
    %292 = vmatprep.subr.mxu0 0.0
    %293 = vmatpush1.msra.mxu0 0.0
    %294 = vmatprep.subr.mxu0 0.0
    %295 = vmatpush1.msra.mxu0 0.0
    %296 = vmatprep.subr.mxu0 0.0
    %297 = vmatpush1.msra.mxu0 0.0
    %298 = vmatprep.subr.mxu0 0.0
    %299 = vmatpush1.msra.mxu0 0.0
    %300 = vmatprep.subr.mxu0 0.0
    %301 = vmatpush1.msra.mxu0 0.0
    %302 = vmatprep.subr.mxu0 0.0
    %303 = vmatpush1.msra.mxu0 0.0
    %304 = vmatprep.subr.mxu0 0.0
    %305 = vmatpush1.msra.mxu0 0.0
    %306 = vmatprep.subr.mxu0 0.0
    %307 = vmatpush1.msra.mxu0 0.0
    %308 = vmatprep.subr.mxu0 0.0
    %309 = vmatpush1.msra.mxu0 0.0
    %310 = vmatprep.subr.mxu0 0.0
    %311 = vmatpush1.msra.mxu0 0.0
    %312 = vmatprep.subr.mxu0 0.0
    %313 = vmatpush1.msra.mxu0 0.0
    %314 = vmatprep.subr.mxu0 0.0
    %315 = vmatpush1.msra.mxu0 0.0
    %316 = vmatprep.subr.mxu0 0.0
    %317 = vmatpush1.msra.mxu0 0.0
    %318 = vmatprep.subr.mxu0 0.0
    %319 = vmatpush1.msra.mxu0 0.0
    %320 = vmatprep.subr.mxu0 0.0
    %321 = vmatpush1.msra.mxu0 0.0
    %322 = vmatprep.subr.mxu0 0.0
    %323 = vmatpush1.msra.mxu0 0.0
    %324 = vmatprep.subr.mxu0 0.0
    %325 = vmatpush1.msra.mxu0 0.0
    %326 = vmatprep.mubr.f32.mxu0 0.0
    %327 = vmatmul.mubr.f32.gmra.mrb[0].mxu0 %v260
    %v328 = vpop.f32.mrb[0].mxu0
    %v329 = vadd.f32 %v256, %v328
    %v330 = vpop.f32.mrb[0].mxu0
    %331 = vdwg.mxu0
    %v332 = vsel %vm46, %v329, 0.0
    %v333 = vrot.slane %v332, 4
    %v334 = vadd.f32 %v332, %v333
    %v335 = vrot.slane %v334, 2
    %v336 = vadd.f32 %v334, %v335
    %v337 = vrot.slane %v336, 1
    %v338 = vadd.f32 %v336, %v337
    %v339 = vmul.f32 %v338, 0.125
    %v340 = vsub.f32 %v329, %v339
    %v341 = vmul.f32 %v340, %v340
    %v342 = vsel %vm46, %v341, 0.0
    %v343 = vrot.slane %v342, 4
    %v344 = vadd.f32 %v342, %v343
    %v345 = vrot.slane %v344, 2
    %v346 = vadd.f32 %v344, %v345
    %v347 = vrot.slane %v346, 1
    %v348 = vadd.f32 %v346, %v347
    %v349 = vmul.f32 %v348, 0.125
    %v350 = vadd.f32 %v349, 1e-05
    %v351 = vrsqrt.pop %v350
    %v352 = vmul.f32 %v340, %v351
    %v353 = vmul.f32 %v352, 0.1
    %v354 = vmax.f32 %v352, %v353
    %v355 = vld [vmem:[#allocation5 + $0x58] sm:$0xff]
    %v356 = vld [vmem:[#allocation5 + $0x60] sm:$0xff]
    %v357 = vld [vmem:[#allocation5 + $0x68] sm:$0xff]
    %vm358 = vcmask 64512
    %v360 = vsel %vm358, %v223, 0
    %362 = vmatprep.subr.mxu0 0.0
    %363 = vmatpush1.msra.mxu0 %v357
    %364 = vmatprep.subr.mxu0 0.0
    %365 = vmatpush1.msra.mxu0 0.0
    %366 = vmatprep.subr.mxu0 0.0
    %367 = vmatpush1.msra.mxu0 0.0
    %368 = vmatprep.subr.mxu0 0.0
    %369 = vmatpush1.msra.mxu0 0.0
    %370 = vmatprep.subr.mxu0 0.0
    %371 = vmatpush1.msra.mxu0 0.0
    %372 = vmatprep.subr.mxu0 0.0
    %373 = vmatpush1.msra.mxu0 0.0
    %374 = vmatprep.subr.mxu0 0.0
    %375 = vmatpush1.msra.mxu0 0.0
    %376 = vmatprep.subr.mxu0 0.0
    %377 = vmatpush1.msra.mxu0 0.0
    %378 = vmatprep.subr.mxu0 0.0
    %379 = vmatpush1.msra.mxu0 0.0
    %380 = vmatprep.subr.mxu0 0.0
    %381 = vmatpush1.msra.mxu0 0.0
    %382 = vmatprep.subr.mxu0 0.0
    %383 = vmatpush1.msra.mxu0 0.0
    %384 = vmatprep.subr.mxu0 0.0
    %385 = vmatpush1.msra.mxu0 0.0
    %386 = vmatprep.subr.mxu0 0.0
    %387 = vmatpush1.msra.mxu0 0.0
    %388 = vmatprep.subr.mxu0 0.0
    %389 = vmatpush1.msra.mxu0 0.0
    %390 = vmatprep.subr.mxu0 0.0
    %391 = vmatpush1.msra.mxu0 0.0
    %392 = vmatprep.subr.mxu0 0.0
    %393 = vmatpush1.msra.mxu0 0.0
    %394 = vmatprep.subr.mxu0 0.0
    %395 = vmatpush1.msra.mxu0 0.0
    %396 = vmatprep.subr.mxu0 0.0
    %397 = vmatpush1.msra.mxu0 0.0
    %398 = vmatprep.subr.mxu0 0.0
    %399 = vmatpush1.msra.mxu0 0.0
    %400 = vmatprep.subr.mxu0 0.0
    %401 = vmatpush1.msra.mxu0 0.0
    %402 = vmatprep.subr.mxu0 0.0
    %403 = vmatpush1.msra.mxu0 0.0
    %404 = vmatprep.subr.mxu0 0.0
    %405 = vmatpush1.msra.mxu0 0.0
    %406 = vmatprep.subr.mxu0 0.0
    %407 = vmatpush1.msra.mxu0 0.0
    %408 = vmatprep.subr.mxu0 0.0
    %409 = vmatpush1.msra.mxu0 0.0
    %410 = vmatprep.subr.mxu0 0.0
    %411 = vmatpush1.msra.mxu0 0.0
    %412 = vmatprep.subr.mxu0 0.0
    %413 = vmatpush1.msra.mxu0 0.0
    %414 = vmatprep.subr.mxu0 0.0
    %415 = vmatpush1.msra.mxu0 0.0
    %416 = vmatprep.subr.mxu0 0.0
    %417 = vmatpush1.msra.mxu0 0.0
    %418 = vmatprep.subr.mxu0 0.0
    %419 = vmatpush1.msra.mxu0 0.0
    %420 = vmatprep.subr.mxu0 0.0
    %421 = vmatpush1.msra.mxu0 0.0
    %422 = vmatprep.subr.mxu0 0.0
    %423 = vmatpush1.msra.mxu0 0.0
    %424 = vmatprep.subr.mxu0 0.0
    %425 = vmatpush1.msra.mxu0 0.0
    %426 = vmatprep.mubr.f32.mxu0 0.0
    %427 = vmatmul.mubr.f32.gmra.mrb[0].mxu0 %v360
    %v428 = vpop.f32.mrb[0].mxu0
    %v429 = vadd.f32 0.0, %v428
    %v430 = vpop.f32.mrb[0].mxu0
    %431 = vdwg.mxu0
    %v433 = vsel %vm46, %v354, 0
    %435 = vmatprep.subr.mxu0 0.0
    %436 = vmatpush1.msra.mxu0 %v355
    %437 = vmatprep.subr.mxu0 0.0
    %438 = vmatpush1.msra.mxu0 %v356
    %439 = vmatprep.subr.mxu0 0.0
    %440 = vmatpush1.msra.mxu0 0.0
    %441 = vmatprep.subr.mxu0 0.0
    %442 = vmatpush1.msra.mxu0 0.0
    %443 = vmatprep.subr.mxu0 0.0
    %444 = vmatpush1.msra.mxu0 0.0
    %445 = vmatprep.subr.mxu0 0.0
    %446 = vmatpush1.msra.mxu0 0.0
    %447 = vmatprep.subr.mxu0 0.0
    %448 = vmatpush1.msra.mxu0 0.0
    %449 = vmatprep.subr.mxu0 0.0
    %450 = vmatpush1.msra.mxu0 0.0
    %451 = vmatprep.subr.mxu0 0.0
    %452 = vmatpush1.msra.mxu0 0.0
    %453 = vmatprep.subr.mxu0 0.0
    %454 = vmatpush1.msra.mxu0 0.0
    %455 = vmatprep.subr.mxu0 0.0
    %456 = vmatpush1.msra.mxu0 0.0
    %457 = vmatprep.subr.mxu0 0.0
    %458 = vmatpush1.msra.mxu0 0.0
    %459 = vmatprep.subr.mxu0 0.0
    %460 = vmatpush1.msra.mxu0 0.0
    %461 = vmatprep.subr.mxu0 0.0
    %462 = vmatpush1.msra.mxu0 0.0
    %463 = vmatprep.subr.mxu0 0.0
    %464 = vmatpush1.msra.mxu0 0.0
    %465 = vmatprep.subr.mxu0 0.0
    %466 = vmatpush1.msra.mxu0 0.0
    %467 = vmatprep.subr.mxu0 0.0
    %468 = vmatpush1.msra.mxu0 0.0
    %469 = vmatprep.subr.mxu0 0.0
    %470 = vmatpush1.msra.mxu0 0.0
    %471 = vmatprep.subr.mxu0 0.0
    %472 = vmatpush1.msra.mxu0 0.0
    %473 = vmatprep.subr.mxu0 0.0
    %474 = vmatpush1.msra.mxu0 0.0
    %475 = vmatprep.subr.mxu0 0.0
    %476 = vmatpush1.msra.mxu0 0.0
    %477 = vmatprep.subr.mxu0 0.0
    %478 = vmatpush1.msra.mxu0 0.0
    %479 = vmatprep.subr.mxu0 0.0
    %480 = vmatpush1.msra.mxu0 0.0
    %481 = vmatprep.subr.mxu0 0.0
    %482 = vmatpush1.msra.mxu0 0.0
    %483 = vmatprep.subr.mxu0 0.0
    %484 = vmatpush1.msra.mxu0 0.0
    %485 = vmatprep.subr.mxu0 0.0
    %486 = vmatpush1.msra.mxu0 0.0
    %487 = vmatprep.subr.mxu0 0.0
    %488 = vmatpush1.msra.mxu0 0.0
    %489 = vmatprep.subr.mxu0 0.0
    %490 = vmatpush1.msra.mxu0 0.0
    %491 = vmatprep.subr.mxu0 0.0
    %492 = vmatpush1.msra.mxu0 0.0
    %493 = vmatprep.subr.mxu0 0.0
    %494 = vmatpush1.msra.mxu0 0.0
    %495 = vmatprep.subr.mxu0 0.0
    %496 = vmatpush1.msra.mxu0 0.0
    %497 = vmatprep.subr.mxu0 0.0
    %498 = vmatpush1.msra.mxu0 0.0
    %499 = vmatprep.mubr.f32.mxu0 0.0
    %500 = vmatmul.mubr.f32.gmra.mrb[0].mxu0 %v433
    %v501 = vpop.f32.mrb[0].mxu0
    %v502 = vadd.f32 %v429, %v501
    %v503 = vpop.f32.mrb[0].mxu0
    %504 = vdwg.mxu0
    %v505 = vld [vmem:[#allocation5 + $0x70] sm:$0x1]
    %v506 = vlaneseq
    %v507 = vshrl.u32 %v506, 7
    %v508 = vsub.s32 0, %v507
    %v509 = vrot.slane %v505, %v508
    %v510 = vadd.f32 %v502, %v509
    %v511 = vsel %vm120, %v510, 0.0
    %v512 = vrot.slane %v511, 4
    %v513 = vadd.f32 %v511, %v512
    %v514 = vrot.slane %v513, 2
    %v515 = vadd.f32 %v513, %v514
    %v516 = vrot.slane %v515, 1
    %v517 = vadd.f32 %v515, %v516
    %v518 = vmul.f32 %v517, 0.125
    %v519 = vsub.f32 %v510, %v518
    %v520 = vmul.f32 %v519, %v519
    %v521 = vsel %vm120, %v520, 0.0
    %v522 = vrot.slane %v521, 4
    %v523 = vadd.f32 %v521, %v522
    %v524 = vrot.slane %v523, 2
    %v525 = vadd.f32 %v523, %v524
    %v526 = vrot.slane %v525, 1
    %v527 = vadd.f32 %v525, %v526
    %v528 = vmul.f32 %v527, 0.125
    %v529 = vadd.f32 %v528, 1e-05
    %v530 = vrsqrt.pop %v529
    %v531 = vmul.f32 %v519, %v530
    %v532 = vmul.f32 %v531, 0.1
    %v533 = vmax.f32 %v531, %v532
    %v534 = vld [vmem:[#allocation5 + $0x78] sm:$0xff]
    %v535 = vld [vmem:[#allocation5 + $0x80] sm:$0xff]
    %v536 = vld [vmem:[#allocation5 + $0x88] sm:$0xff]
    %v537 = vld [vmem:[#allocation5 + $0x90] sm:$0xff]
    %v538 = vld [vmem:[#allocation5 + $0x98] sm:$0x1]
    %v539 = vlaneseq
    %v540 = vshrl.u32 %v539, 7
    %v541 = vsub.s32 0, %v540
    %v542 = vrot.slane %v538, %v541
    %v544 = vsel %vm120, %v533, 0
    %546 = vmatprep.subr.mxu0 0.0
    %547 = vmatpush1.msra.mxu0 %v534
    %548 = vmatprep.subr.mxu0 0.0
    %549 = vmatpush1.msra.mxu0 %v535
    %550 = vmatprep.subr.mxu0 0.0
    %551 = vmatpush1.msra.mxu0 %v536
    %552 = vmatprep.subr.mxu0 0.0
    %553 = vmatpush1.msra.mxu0 %v537
    %554 = vmatprep.subr.mxu0 0.0
    %555 = vmatpush1.msra.mxu0 0.0
    %556 = vmatprep.subr.mxu0 0.0
    %557 = vmatpush1.msra.mxu0 0.0
    %558 = vmatprep.subr.mxu0 0.0
    %559 = vmatpush1.msra.mxu0 0.0
    %560 = vmatprep.subr.mxu0 0.0
    %561 = vmatpush1.msra.mxu0 0.0
    %562 = vmatprep.subr.mxu0 0.0
    %563 = vmatpush1.msra.mxu0 0.0
    %564 = vmatprep.subr.mxu0 0.0
    %565 = vmatpush1.msra.mxu0 0.0
    %566 = vmatprep.subr.mxu0 0.0
    %567 = vmatpush1.msra.mxu0 0.0
    %568 = vmatprep.subr.mxu0 0.0
    %569 = vmatpush1.msra.mxu0 0.0
    %570 = vmatprep.subr.mxu0 0.0
    %571 = vmatpush1.msra.mxu0 0.0
    %572 = vmatprep.subr.mxu0 0.0
    %573 = vmatpush1.msra.mxu0 0.0
    %574 = vmatprep.subr.mxu0 0.0
    %575 = vmatpush1.msra.mxu0 0.0
    %576 = vmatprep.subr.mxu0 0.0
    %577 = vmatpush1.msra.mxu0 0.0
    %578 = vmatprep.subr.mxu0 0.0
    %579 = vmatpush1.msra.mxu0 0.0
    %580 = vmatprep.subr.mxu0 0.0
    %581 = vmatpush1.msra.mxu0 0.0
    %582 = vmatprep.subr.mxu0 0.0
    %583 = vmatpush1.msra.mxu0 0.0
    %584 = vmatprep.subr.mxu0 0.0
    %585 = vmatpush1.msra.mxu0 0.0
    %586 = vmatprep.subr.mxu0 0.0
    %587 = vmatpush1.msra.mxu0 0.0
    %588 = vmatprep.subr.mxu0 0.0
    %589 = vmatpush1.msra.mxu0 0.0
    %590 = vmatprep.subr.mxu0 0.0
    %591 = vmatpush1.msra.mxu0 0.0
    %592 = vmatprep.subr.mxu0 0.0
    %593 = vmatpush1.msra.mxu0 0.0
    %594 = vmatprep.subr.mxu0 0.0
    %595 = vmatpush1.msra.mxu0 0.0
    %596 = vmatprep.subr.mxu0 0.0
    %597 = vmatpush1.msra.mxu0 0.0
    %598 = vmatprep.subr.mxu0 0.0
    %599 = vmatpush1.msra.mxu0 0.0
    %600 = vmatprep.subr.mxu0 0.0
    %601 = vmatpush1.msra.mxu0 0.0
    %602 = vmatprep.subr.mxu0 0.0
    %603 = vmatpush1.msra.mxu0 0.0
    %604 = vmatprep.subr.mxu0 0.0
    %605 = vmatpush1.msra.mxu0 0.0
    %606 = vmatprep.subr.mxu0 0.0
    %607 = vmatpush1.msra.mxu0 0.0
    %608 = vmatprep.subr.mxu0 0.0
    %609 = vmatpush1.msra.mxu0 0.0
    %610 = vmatprep.mubr.f32.mxu0 0.0
    %611 = vmatmul.mubr.f32.gmra.mrb[0].mxu0 %v544
    %v612 = vpop.f32.mrb[0].mxu0
    %v613 = vadd.f32 %v542, %v612
    %v614 = vpop.f32.mrb[0].mxu0
    %615 = vdwg.mxu0
    %616 = vst [vmem:[#allocation7] sm:$0xff] %v613
    // Predicated region
    $region18: #{ladder_forward.1} parent=1 // pred_check
      _
    $region19: #{ladder_forward.1} parent=1 // pred_check_branch
      %618 = sbr.rel (0) target = $region21
    $region20: #{ladder_forward.1} parent=1 // pred_region
      %s620 = ssub.s32 128, 128
      %621 = vsyncadd [#allocation4], %s620
      %s623 = sshll.u32 [#allocation7], 4
      %s624 = int_to_ptr.vmem [resolvable:$true] %s623
      %626 = dma.vmem_to_hbm [thread:$0]  %s624, 128, %s2, [#allocation4]
    $region21: #{ladder_forward.1} parent=1 // pred_fallthru
      _
    // Predicated region
    $region22: #{ladder_forward.1} parent=1 // pred_check
      _
    $region23: #{ladder_forward.1} parent=1 // pred_check_branch
      %628 = sbr.rel (0) target = $region25
    $region24: #{ladder_forward.1} parent=1 // pred_region
      %629 = dma.done [#allocation4], 128
    $region25: #{ladder_forward.1} parent=1 // pred_fallthru
      _
    %630 = vsyncpa [#allocation3], 1
    %631 = vsyncpa [#allocation6], 1
    %632 = vsyncpa [#allocation4], 1

</llo_original>
